<compile_context>
chip_gen: v5e
topology: v5e:2x2
jax: 0.10.0
libtpu: 0.0.40
codegen_flags: <defaults>
</compile_context>

<pallas_src>
import functools

import jax
import jax.numpy as jnp
from jax.experimental import pallas as pl
from jax.experimental.pallas import tpu as pltpu

_LANES = 128
_SUBLANES = 8


def _round_up(x, m):
    return ((x + m - 1) // m) * m


def _partial_sq_sum_kernel(a_ref, b_ref, o_ref, *, tile_rows):
    """Accumulate sum((a-b)^2) of this tile into a vreg-shaped (8,128) partial.

    o_ref is the (8, 128) output block for this parallel split; it stays
    resident in VMEM across the (last, "arbitrary") reduction grid axis.
    """
    k = pl.program_id(1)

    @pl.when(k == 0)
    def _():
        o_ref[...] = jnp.zeros_like(o_ref)

    # Cast each operand to f32 *before* subtracting (bit-parity for bf16 inputs).
    a = a_ref[...].astype(jnp.float32)
    b = b_ref[...].astype(jnp.float32)
    d = a - b
    sq = d * d  # (tile_rows, 128)

    # Fold (tile_rows, 128) down to one vreg (8, 128): reshape groups whole
    # vregs, and the axis-0 sum is pure elementwise VPU adds (no XLU work
    # inside the streaming loop).
    o_ref[...] += sq.reshape(tile_rows // _SUBLANES, _SUBLANES, _LANES).sum(axis=0)


def my_loss(
    inactive_embeddings,
    neighbor_embeddings,
    l2,
    *,
    tile_rows=8192,          # 8192 x 128 x 4B = 4 MiB per input tile (f32)
    num_splits=2,            # 2 partial sums -> maps to the 2 TCs on v7x
    small_input_threshold=1 << 15,   # below ~32K elements, let XLA fuse it
    force_kernel=False,
):
    """Pallas implementation of myLoss.forward. Inputs: same-shape float arrays."""
    a = inactive_embeddings
    b = neighbor_embeddings
    assert a.shape == b.shape, (a.shape, b.shape)

    total = a.size
    if total == 0:
        return jnp.float32(0.0)

    if (not force_kernel) and total < small_input_threshold:
        # Tiny problem: kernel launch + pipeline prologue dominate; XLA wins.
        return jnp.float32(l2) * jnp.sum(
            jnp.square(a.astype(jnp.float32) - b.astype(jnp.float32))
        )

    # ---- lane-dense repack: flatten and pad to (padded_rows, 128) ----------
    rows = _round_up(pl.cdiv(total, _LANES), _SUBLANES)
    t_rows = _round_up(min(tile_rows, rows), _SUBLANES)
    splits = num_splits if rows >= num_splits * t_rows else 1
    k_per_split = pl.cdiv(rows, splits * t_rows)
    padded_rows = splits * k_per_split * t_rows
    padded_total = padded_rows * _LANES

    def _prep(x):
        x = x.reshape(-1)
        pad = padded_total - total
        if pad:
            x = jnp.concatenate([x, jnp.zeros((pad,), dtype=x.dtype)])
        return x.reshape(padded_rows, _LANES)

    a2 = _prep(a)
    b2 = _prep(b)

    # 2 inputs x double-buffered tiles + headroom; fits comfortably in v7x's
    # 64 MiB physical VMEM with the default tile, and lifts v5e's 16 MiB
    # scoped default so the big tiles actually compile there.
    tile_bytes = t_rows * _LANES * a2.dtype.itemsize
    vmem_limit = int(max(4 * tile_bytes + (4 << 20), 16 << 20))

    kernel = functools.partial(_partial_sq_sum_kernel, tile_rows=t_rows)

    partials = pl.pallas_call(
        kernel,
        out_shape=jax.ShapeDtypeStruct((splits, _SUBLANES, _LANES), jnp.float32),
        grid_spec=pltpu.PrefetchScalarGridSpec(
            num_scalar_prefetch=0,
            grid=(splits, k_per_split),
            in_specs=[
                pl.BlockSpec(
                    (t_rows, _LANES),
                    lambda s, k, kps=k_per_split: (s * kps + k, 0),
                ),
                pl.BlockSpec(
                    (t_rows, _LANES),
                    lambda s, k, kps=k_per_split: (s * kps + k, 0),
                ),
            ],
            # Leading dim squeezed: kernel sees an (8, 128) accumulator block
            # per parallel split, resident across the reduction axis.
            out_specs=pl.BlockSpec((None, _SUBLANES, _LANES), lambda s, k: (s, 0, 0)),
        ),
        compiler_params=pltpu.CompilerParams(
            dimension_semantics=("parallel", "arbitrary"),
            vmem_limit_bytes=vmem_limit,
        ),
    )(a2, b2)

    # Single final cross-lane/sublane reduction + l2 scale (tiny, done in XLA).
    return jnp.float32(l2) * jnp.sum(partials)


if __name__ == "__main__":
    key = jax.random.PRNGKey(0)
    k1, k2 = jax.random.split(key)

    # Small embedding batch (64 vectors of hidden size 96); force the Pallas
    # path so the kernel itself is exercised even below the tiny-input cutoff.
    N, D = 64, 96
    l2 = 0.5

    inactive = jax.random.normal(k1, (N, D), dtype=jnp.float32)
    neighbor = jax.random.normal(k2, (N, D), dtype=jnp.float32)

    out = my_loss(inactive, neighbor, l2, force_kernel=True)
    out = jax.block_until_ready(out)

    # sanity check vs. plain JAX reference
    ref = l2 * jnp.sum(jnp.square(inactive - neighbor))
    assert jnp.allclose(out, ref, rtol=1e-5, atol=1e-5), (out, ref)

    print("KERNEL_OK")
</pallas_src>

<mosaic_0001>
module attributes {stable_mosaic.version = 11 : i64} {
  func.func @_partial_sq_sum_kernel(%arg0: i32, %arg1: i32, %arg2: memref<48x128xf32, #tpu.memory_space<vmem>>, %arg3: memref<48x128xf32, #tpu.memory_space<vmem>>, %arg4: memref<1x8x128xf32, #tpu.memory_space<vmem>>) attributes {dimension_semantics = [#tpu.dimension_semantics<parallel>, #tpu.dimension_semantics<arbitrary>], iteration_bounds = array<i64: 1, 1>, scalar_prefetch = 0 : i64, scratch_operands = 0 : i64, tpu.core_type = #tpu.core_type<tc>, window_params = [{transform_indices = @transform_0, window_bounds = array<i64: 48, 128>}, {transform_indices = @transform_1, window_bounds = array<i64: 48, 128>}, {transform_indices = @transform_2, window_bounds = array<i64: 1, 8, 128>}]} {
    %c0_i32 = arith.constant 0 : i32
    %0 = arith.cmpi eq, %arg1, %c0_i32 : i32
    %1 = arith.extui %0 : i1 to i32
    %c0_i32_0 = arith.constant 0 : i32
    %2 = arith.cmpi ne, %1, %c0_i32_0 : i32
    scf.if %2 {
      %cst_10 = arith.constant 0.000000e+00 : f32
      %15 = vector.broadcast %cst_10 : f32 to vector<8x128xf32>
      %c0_11 = arith.constant 0 : index
      %c0_12 = arith.constant 0 : index
      %c0_13 = arith.constant 0 : index
      %16 = vector.load %arg4[%c0_11, %c0_12, %c0_13] : memref<1x8x128xf32, #tpu.memory_space<vmem>>, vector<1x8x128xf32>
      %17 = vector.shape_cast %16 : vector<1x8x128xf32> to vector<8x128xf32>
      %18 = vector.shape_cast %15 : vector<8x128xf32> to vector<1x8x128xf32>
      tpu.vector_store %arg4[%c0_11, %c0_12, %c0_13], %18 {strides = array<i32>} : memref<1x8x128xf32, #tpu.memory_space<vmem>>, vector<1x8x128xf32>,
    } else {
    }
    %c0 = arith.constant 0 : index
    %c0_1 = arith.constant 0 : index
    %3 = vector.load %arg2[%c0, %c0_1] : memref<48x128xf32, #tpu.memory_space<vmem>>, vector<48x128xf32>
    %c0_2 = arith.constant 0 : index
    %c0_3 = arith.constant 0 : index
    %4 = vector.load %arg3[%c0_2, %c0_3] : memref<48x128xf32, #tpu.memory_space<vmem>>, vector<48x128xf32>
    %5 = arith.subf %3, %4 : vector<48x128xf32>
    %6 = arith.mulf %5, %5 : vector<48x128xf32>
    %c0_4 = arith.constant 0 : index
    %c0_5 = arith.constant 0 : index
    %c0_6 = arith.constant 0 : index
    %7 = vector.load %arg4[%c0_4, %c0_5, %c0_6] : memref<1x8x128xf32, #tpu.memory_space<vmem>>, vector<1x8x128xf32>
    %8 = vector.shape_cast %7 : vector<1x8x128xf32> to vector<8x128xf32>
    %9 = vector.shape_cast %6 : vector<48x128xf32> to vector<6x8x128xf32>
    %cst = arith.constant dense<0.000000e+00> : vector<8x128xf32>
    %10 = vector.multi_reduction <add>, %9, %cst [0] : vector<6x8x128xf32> to vector<8x128xf32>
    %11 = arith.addf %8, %10 : vector<8x128xf32>
    %c0_7 = arith.constant 0 : index
    %c0_8 = arith.constant 0 : index
    %c0_9 = arith.constant 0 : index
    %12 = vector.load %arg4[%c0_7, %c0_8, %c0_9] : memref<1x8x128xf32, #tpu.memory_space<vmem>>, vector<1x8x128xf32>
    %13 = vector.shape_cast %12 : vector<1x8x128xf32> to vector<8x128xf32>
    %14 = vector.shape_cast %11 : vector<8x128xf32> to vector<1x8x128xf32>
    tpu.vector_store %arg4[%c0_7, %c0_8, %c0_9], %14 {strides = array<i32>} : memref<1x8x128xf32, #tpu.memory_space<vmem>>, vector<1x8x128xf32>,
    return
  }
  func.func @transform_0(%arg0: i32, %arg1: i32) -> (i32, i32) {
    %c1_i32 = arith.constant 1 : i32
    %0 = arith.muli %arg0, %c1_i32 : i32
    %1 = arith.addi %0, %arg1 : i32
    %c0_i32 = arith.constant 0 : i32
    %c0_i32_0 = arith.constant 0 : i32
    return %1, %c0_i32 : i32, i32
  }
  func.func @transform_1(%arg0: i32, %arg1: i32) -> (i32, i32) {
    %c1_i32 = arith.constant 1 : i32
    %0 = arith.muli %arg0, %c1_i32 : i32
    %1 = arith.addi %0, %arg1 : i32
    %c0_i32 = arith.constant 0 : i32
    %c0_i32_0 = arith.constant 0 : i32
    return %1, %c0_i32 : i32, i32
  }
  func.func @transform_2(%arg0: i32, %arg1: i32) -> (i32, i32, i32) {
    %c0_i32 = arith.constant 0 : i32
    %c0_i32_0 = arith.constant 0 : i32
    %c0_i32_1 = arith.constant 0 : i32
    return %arg0, %c0_i32, %c0_i32_0 : i32, i32, i32
  }
}

</mosaic_0001>

<llo_original>
// kernel: tpu_custom_call.1
$region0: #{tpu_custom_call.1}
  #allocation0 [shape = 'u32[]', space=smem, size = 0x4, offset = 0x4, fixed_abs, tag = 'smem constant byte address 0x4 - core index']
  #allocation1 [shape = 'u32[72,128]{1,0:T(1,128)}', space=vmem, size = 0x9000, scoped, tag = 'internal scratch']
  %s0 = inlined_call_operand.hbm [shape: f32[48,128], index: 0, kind: input, shape index: {}]
  %s1 = inlined_call_operand.hbm [shape: f32[48,128], index: 1, kind: input, shape index: {}]
  %s2 = inlined_call_operand.hbm [shape: f32[1,8,128], index: 2, kind: output, shape index: {}]
  %s3 = sld [smem:[#allocation0]]
  $region30: #{tpu_custom_call.1} parent=0
    _
  %s5 = ssub.s32 1, %s3
  %s6 = scalar_select 0, %s5, %s3
  $region1: #{tpu_custom_call.1} parent=0
    #allocation2 [shape = 'u8[24576]{0}', space=vmem, size = 0x6000, scoped, tag = 'input window, operand 0, single buffered']
    #allocation3 [shape = 's32[1]{0}', space=sflag, size = 0x4, scoped, tag = 'scoped memory for tpu_custom_call.1']
    #allocation4 [shape = 's32[1]{0}', space=sflag, size = 0x4, scoped, tag = 'scoped memory for tpu_custom_call.1']
    #allocation5 [shape = 'u8[24576]{0}', space=vmem, size = 0x6000, scoped, tag = 'input window, operand 1, single buffered']
    #allocation6 [shape = 's32[1]{0}', space=sflag, size = 0x4, scoped, tag = 'scoped memory for tpu_custom_call.1']
    #allocation7 [shape = 'u8[4096]{0}', space=vmem, size = 0x1000, scoped, tag = 'output window, operand 0, single buffered']
    %7 = vsyncpa [#allocation3], 0
    %8 = vsyncpa [#allocation6], 0
    %9 = vsyncpa [#allocation4], 0
    // Predicated region
    $region2: #{tpu_custom_call.1} parent=1 // pred_check
      _
    $region3: #{tpu_custom_call.1} parent=1 // pred_check_branch
      %11 = sbr.rel (0) target = $region5
    $region4: #{tpu_custom_call.1} parent=1 // pred_region
      %s12 = sadd.s32 0, 0
      %s13 = smul.u32 6, %s12
      %15 = vsyncadd [#allocation3], 0
      %s16 = smul.addr %s13, 8
      %s17 = scalar_lea.hbm %s0, %s16
      %s18 = sshll.u32 %s17, 4
      %s19 = int_to_ptr.hbm [resolvable:$true] %s18
      %s20 = sshll.u32 [#allocation2], 4
      %s21 = int_to_ptr.vmem [resolvable:$true] %s20
      %26 = dma.hbm_to_vmem [thread:$0]  %s19, 768, %s21, [#allocation3], 128, 128, 8
    $region5: #{tpu_custom_call.1} parent=1 // pred_fallthru
      _
    // Predicated region
    $region6: #{tpu_custom_call.1} parent=1 // pred_check
      _
    $region7: #{tpu_custom_call.1} parent=1 // pred_check_branch
      %28 = sbr.rel (0) target = $region9
    $region8: #{tpu_custom_call.1} parent=1 // pred_region
      %s29 = sadd.s32 0, 0
      %s30 = smul.u32 6, %s29
      %32 = vsyncadd [#allocation6], 0
      %s33 = smul.addr %s30, 8
      %s34 = scalar_lea.hbm %s1, %s33
      %s35 = sshll.u32 %s34, 4
      %s36 = int_to_ptr.hbm [resolvable:$true] %s35
      %s37 = sshll.u32 [#allocation5], 4
      %s38 = int_to_ptr.vmem [resolvable:$true] %s37
      %43 = dma.hbm_to_vmem [thread:$0]  %s36, 768, %s38, [#allocation6], 128, 128, 8
    $region9: #{tpu_custom_call.1} parent=1 // pred_fallthru
      _
    // Predicated region
    $region10: #{tpu_custom_call.1} parent=1 // pred_check
      _
    $region11: #{tpu_custom_call.1} parent=1 // pred_check_branch
      %45 = sbr.rel (0) target = $region13
    $region12: #{tpu_custom_call.1} parent=1 // pred_region
      %47 = dma.done [#allocation3], 768
    $region13: #{tpu_custom_call.1} parent=1 // pred_fallthru
      _
    // Predicated region
    $region14: #{tpu_custom_call.1} parent=1 // pred_check
      _
    $region15: #{tpu_custom_call.1} parent=1 // pred_check_branch
      %49 = sbr.rel (0) target = $region17
    $region16: #{tpu_custom_call.1} parent=1 // pred_region
      %51 = dma.done [#allocation6], 768
    $region17: #{tpu_custom_call.1} parent=1 // pred_fallthru
      _
    %s52 = sadd.s32 0, 0
    %s53 = smul.u32 6, %s52
    %s54 = sadd.s32 0, 0
    %s55 = smul.u32 6, %s54
    %p56 = scmp.eq.s32.totalorder 0, 0
    // Predicated region
    $region18: #{tpu_custom_call.1} parent=1 // pred_check
      %p57 = pneg %p56
    $region19: #{tpu_custom_call.1} parent=1 // pred_check_branch
      %59 = sbr.rel (%p57) target = $region21
    $region20: #{tpu_custom_call.1} parent=1 // pred_region
      %60 = vst [vmem:[#allocation7] sm:$0xff] 0.0
    $region21: #{tpu_custom_call.1} parent=1 // pred_fallthru
      _
    %v61 = vld [vmem:[#allocation2] sm:$0xff]
    %v62 = vld [vmem:[#allocation2 + $0x8] sm:$0xff]
    %v63 = vld [vmem:[#allocation2 + $0x10] sm:$0xff]
    %v64 = vld [vmem:[#allocation2 + $0x18] sm:$0xff]
    %v65 = vld [vmem:[#allocation2 + $0x20] sm:$0xff]
    %v66 = vld [vmem:[#allocation2 + $0x28] sm:$0xff]
    %v67 = vld [vmem:[#allocation5] sm:$0xff]
    %v68 = vld [vmem:[#allocation5 + $0x8] sm:$0xff]
    %v69 = vld [vmem:[#allocation5 + $0x10] sm:$0xff]
    %v70 = vld [vmem:[#allocation5 + $0x18] sm:$0xff]
    %v71 = vld [vmem:[#allocation5 + $0x20] sm:$0xff]
    %v72 = vld [vmem:[#allocation5 + $0x28] sm:$0xff]
    %v73 = vsub.f32 %v61, %v67
    %v74 = vsub.f32 %v62, %v68
    %v75 = vsub.f32 %v63, %v69
    %v76 = vsub.f32 %v64, %v70
    %v77 = vsub.f32 %v65, %v71
    %v78 = vsub.f32 %v66, %v72
    %v79 = vmul.f32 %v73, %v73
    %v80 = vmul.f32 %v74, %v74
    %v81 = vmul.f32 %v75, %v75
    %v82 = vmul.f32 %v76, %v76
    %v83 = vmul.f32 %v77, %v77
    %v84 = vmul.f32 %v78, %v78
    %v85 = vld [vmem:[#allocation7] sm:$0xff]
    %v86 = vadd.f32 %v79, %v80
    %v87 = vadd.f32 %v86, %v81
    %v88 = vadd.f32 %v87, %v82
    %v89 = vadd.f32 %v88, %v83
    %v90 = vadd.f32 %v89, %v84
    %v91 = vadd.f32 %v85, %v90
    %92 = vst [vmem:[#allocation7] sm:$0xff] %v91
    // Predicated region
    $region22: #{tpu_custom_call.1} parent=1 // pred_check
      _
    $region23: #{tpu_custom_call.1} parent=1 // pred_check_branch
      %94 = sbr.rel (0) target = $region25
    $region24: #{tpu_custom_call.1} parent=1 // pred_region
      %96 = vsyncadd [#allocation4], 0
      %s98 = sshll.u32 [#allocation7], 4
      %s99 = int_to_ptr.vmem [resolvable:$true] %s98
      %s100 = sshll.u32 %s2, 4
      %s101 = int_to_ptr.hbm [resolvable:$true] %s100
      %103 = dma.vmem_to_hbm [thread:$0]  %s99, 128, %s101, [#allocation4]
    $region25: #{tpu_custom_call.1} parent=1 // pred_fallthru
      _
    // Predicated region
    $region26: #{tpu_custom_call.1} parent=1 // pred_check
      _
    $region27: #{tpu_custom_call.1} parent=1 // pred_check_branch
      %105 = sbr.rel (0) target = $region29
    $region28: #{tpu_custom_call.1} parent=1 // pred_region
      %107 = dma.done [#allocation4], 128
    $region29: #{tpu_custom_call.1} parent=1 // pred_fallthru
      _
    %108 = vsyncpa [#allocation3], 1
    %109 = vsyncpa [#allocation6], 1
    %110 = vsyncpa [#allocation4], 1

</llo_original>
